<compile_context>
chip_gen: v7x
topology: tpu7x:2x2x1
jax: 0.10.0
libtpu: 0.0.40
codegen_flags: <defaults>
</compile_context>

<pallas_src>
import jax
import jax.numpy as jnp
from jax.experimental import pallas as pl
from jax.experimental.pallas import tpu as pltpu

_LANE = 128
_MAX_WIDTH = 4096            # widest lane-dense slab we try (longer DMA bursts, unmasked vst)
_TARGET_BLOCK_BYTES = 2 << 20  # ~2 MiB/block: in+out double-buffered = 8 MiB resident,
                               # under v5e's 16 MiB default scoped VMEM and v7x's 32 MiB.


def _square_kernel(x_ref, o_ref):
    x = x_ref[...]
    o_ref[...] = x * x


def _sublane_tile(dtype) -> int:
    # Native packed sublane tile: 8 for 4-byte, 16 for 2-byte, 32 for 1-byte dtypes.
    itemsize = jnp.dtype(dtype).itemsize
    return max(8, 32 // max(1, itemsize))


def _pick_width(n: int) -> int:
    # Largest power-of-two lane width (<= 4096) that divides n exactly -> no padding.
    w = _MAX_WIDTH
    while w > _LANE:
        if n % w == 0:
            return w
        w //= 2
    return _LANE


def square(x: jax.Array) -> jax.Array:
    """Elementwise square via a Pallas TPU kernel (HBM-bandwidth bound)."""
    orig_shape = x.shape
    n = x.size

    # For sizes that aren't 128-contiguous a kernel would force an extra host-side
    # pad + slice pass over HBM, which roughly doubles wall time for a mem-bound op.
    if n == 0 or n % _LANE != 0:
        return jnp.square(x)

    width = _pick_width(n)
    rows = n // width
    x2d = x.reshape(rows, width)  # zero-copy layout reshape (row-major contiguous)

    itemsize = jnp.dtype(x.dtype).itemsize
    sublane = _sublane_tile(x.dtype)

    # Rows per block so the block is ~2 MiB, rounded to the dtype's native sublane tile.
    rows_for_target = max(1, _TARGET_BLOCK_BYTES // (width * itemsize))
    if rows_for_target >= rows:
        block_rows = rows  # full first dim: always a legal block shape
    else:
        block_rows = max(sublane, (rows_for_target // sublane) * sublane)
        if block_rows >= rows:
            block_rows = rows

    # cdiv grid: Pallas masks the ragged final block; no tiny-tile fallback.
    grid = (pl.cdiv(rows, block_rows),)

    out2d = pl.pallas_call(
        _square_kernel,
        out_shape=jax.ShapeDtypeStruct((rows, width), x.dtype),
        grid_spec=pltpu.PrefetchScalarGridSpec(
            num_scalar_prefetch=0,
            grid=grid,
            in_specs=[pl.BlockSpec((block_rows, width), lambda i: (i, 0))],
            out_specs=pl.BlockSpec((block_rows, width), lambda i: (i, 0)),
        ),
        compiler_params=pltpu.CompilerParams(
            dimension_semantics=("parallel",),  # shards grid steps across TCs on v7x
        ),
    )(x2d)

    return out2d.reshape(orig_shape)


if __name__ == "__main__":
    key = jax.random.PRNGKey(0)
    x = jax.random.normal(key, (2, 4, 16, 16), dtype=jnp.float32)

    y = square(x)
    jax.block_until_ready(y)

    # Correctness check against plain JAX reference (exact for x*x).
    ref = jnp.square(x)
    assert y.shape == x.shape and y.dtype == x.dtype
    assert jnp.array_equal(y, ref), "mismatch vs reference"

    print("KERNEL_OK")
</pallas_src>

<mosaic_0001>
module attributes {stable_mosaic.version = 11 : i64} {
  func.func @_square_kernel(%arg0: i32, %arg1: memref<1x2048xf32, #tpu.memory_space<vmem>>, %arg2: memref<1x2048xf32, #tpu.memory_space<vmem>>) attributes {dimension_semantics = [#tpu.dimension_semantics<parallel>], iteration_bounds = array<i64: 1>, scalar_prefetch = 0 : i64, scratch_operands = 0 : i64, tpu.core_type = #tpu.core_type<tc>, window_params = [{transform_indices = @transform_0, window_bounds = array<i64: 1, 2048>}, {transform_indices = @transform_1, window_bounds = array<i64: 1, 2048>}]} {
    %c0 = arith.constant 0 : index
    %c0_0 = arith.constant 0 : index
    %0 = vector.load %arg1[%c0, %c0_0] : memref<1x2048xf32, #tpu.memory_space<vmem>>, vector<1x2048xf32>
    %1 = arith.mulf %0, %0 : vector<1x2048xf32>
    %c0_1 = arith.constant 0 : index
    %c0_2 = arith.constant 0 : index
    %2 = vector.load %arg2[%c0_1, %c0_2] : memref<1x2048xf32, #tpu.memory_space<vmem>>, vector<1x2048xf32>
    tpu.vector_store %arg2[%c0_1, %c0_2], %1 {strides = array<i32>} : memref<1x2048xf32, #tpu.memory_space<vmem>>, vector<1x2048xf32>,
    return
  }
  func.func @transform_0(%arg0: i32) -> (i32, i32) {
    %c0_i32 = arith.constant 0 : i32
    %c0_i32_0 = arith.constant 0 : i32
    return %arg0, %c0_i32 : i32, i32
  }
  func.func @transform_1(%arg0: i32) -> (i32, i32) {
    %c0_i32 = arith.constant 0 : i32
    %c0_i32_0 = arith.constant 0 : i32
    return %arg0, %c0_i32 : i32, i32
  }
}

</mosaic_0001>

<llo_original>
// kernel: tpu_custom_call.1
$region0: #{tpu_custom_call.1}
  #allocation0 [shape = 'u32[]', space=smem, size = 0x4, offset = 0x4, fixed_abs, tag = 'smem constant byte address 0x4 - core index']
  #allocation1 [shape = 'u32[144,128]{1,0:T(1,128)}', space=vmem, size = 0x12000, scoped, tag = 'internal scratch']
  %s0 = inlined_call_operand.hbm [shape: f32[1,2048], index: 0, kind: input, shape index: {}]
  %s1 = inlined_call_operand.hbm [shape: f32[1,2048], index: 1, kind: output, shape index: {}]
  %s2 = sld [smem:[#allocation0]]
  $region18: #{tpu_custom_call.1} parent=0
    _
  %s4 = ssub.s32 1, %s2
  %s5 = scalar_select 0, %s4, %s2
  $region1: #{tpu_custom_call.1} parent=0
    #allocation2 [shape = 'u8[8192]{0}', space=vmem, size = 0x2000, scoped, tag = 'input window, operand 0, single buffered']
    #allocation3 [shape = 's32[1]{0}', space=sflag, size = 0x4, scoped, tag = 'scoped memory for tpu_custom_call.1']
    #allocation4 [shape = 's32[1]{0}', space=sflag, size = 0x4, scoped, tag = 'scoped memory for tpu_custom_call.1']
    #allocation5 [shape = 'u8[8192]{0}', space=vmem, size = 0x2000, scoped, tag = 'output window, operand 0, single buffered']
    %6 = vsyncpa [#allocation3], 0
    %7 = vsyncpa [#allocation4], 0
    // Predicated region
    $region2: #{tpu_custom_call.1} parent=1 // pred_check
      _
    $region3: #{tpu_custom_call.1} parent=1 // pred_check_branch
      %9 = sbr.rel (0) target = $region5
    $region4: #{tpu_custom_call.1} parent=1 // pred_region
      %s11 = ssub.s32 256, 256
      %12 = vsyncadd [#allocation3], %s11
      %s14 = sshll.u32 [#allocation2], 4
      %s15 = int_to_ptr.vmem [resolvable:$true] %s14
      %17 = dma.hbm_to_vmem [thread:$0]  %s0, 256, %s15, [#allocation3]
    $region5: #{tpu_custom_call.1} parent=1 // pred_fallthru
      _
    // Predicated region
    $region6: #{tpu_custom_call.1} parent=1 // pred_check
      _
    $region7: #{tpu_custom_call.1} parent=1 // pred_check_branch
      %19 = sbr.rel (0) target = $region9
    $region8: #{tpu_custom_call.1} parent=1 // pred_region
      %20 = dma.done [#allocation3], 256
    $region9: #{tpu_custom_call.1} parent=1 // pred_fallthru
      _
    %v21 = vld [vmem:[#allocation2] sm:$0xff]
    %v22 = vld [vmem:[#allocation2 + $0x8] sm:$0xff]
    %v23 = vmul.f32 %v21, %v21
    %v24 = vmul.f32 %v22, %v22
    %25 = vst [vmem:[#allocation5] sm:$0xff] %v23
    %26 = vst [vmem:[#allocation5 + $0x8] sm:$0xff] %v24
    // Predicated region
    $region10: #{tpu_custom_call.1} parent=1 // pred_check
      _
    $region11: #{tpu_custom_call.1} parent=1 // pred_check_branch
      %28 = sbr.rel (0) target = $region13
    $region12: #{tpu_custom_call.1} parent=1 // pred_region
      %s30 = ssub.s32 256, 256
      %31 = vsyncadd [#allocation4], %s30
      %s33 = sshll.u32 [#allocation5], 4
      %s34 = int_to_ptr.vmem [resolvable:$true] %s33
      %36 = dma.vmem_to_hbm [thread:$0]  %s34, 256, %s1, [#allocation4]
    $region13: #{tpu_custom_call.1} parent=1 // pred_fallthru
      _
    // Predicated region
    $region14: #{tpu_custom_call.1} parent=1 // pred_check
      _
    $region15: #{tpu_custom_call.1} parent=1 // pred_check_branch
      %38 = sbr.rel (0) target = $region17
    $region16: #{tpu_custom_call.1} parent=1 // pred_region
      %39 = dma.done [#allocation4], 256
    $region17: #{tpu_custom_call.1} parent=1 // pred_fallthru
      _
    %40 = vsyncpa [#allocation3], 1
    %41 = vsyncpa [#allocation4], 1

</llo_original>
